<compile_context>
chip_gen: v7x
topology: tpu7x:2x2x1
jax: 0.10.0
libtpu: 0.0.40
codegen_flags: <defaults>
</compile_context>

<pallas_src>
import functools

import jax
import jax.numpy as jnp
from jax.experimental import pallas as pl
from jax.experimental.pallas import tpu as pltpu


def _round_up(x, m):
    return ((x + m - 1) // m) * m


def mlp_kernel(x_ref, w1_ref, b1_ref, w2_ref, b2_ref, w3t_ref, b3_ref, o_ref,
               *, lane_dense):
    """Fused fc1->ReLU->fc2->ReLU->fc3 on one batch tile.

    Weights arrive already in bf16; activations are cast to bf16 right before
    each MXU matmul, accumulation is f32, bias/ReLU are f32.
    """
    bf16 = jnp.bfloat16
    x = x_ref[...].astype(bf16)

    h1 = jnp.dot(x, w1_ref[...], preferred_element_type=jnp.float32) + b1_ref[...]
    h1 = jnp.maximum(h1, 0.0)

    h2 = jnp.dot(h1.astype(bf16), w2_ref[...],
                 preferred_element_type=jnp.float32) + b2_ref[...]
    h2 = jnp.maximum(h2, 0.0).astype(bf16)

    if lane_dense:
        # output_dim == 1: produce the result directly as a lane-dense
        # (1, block_b) row: (1, hid) @ (hid, block_b). b3 is an SMEM scalar.
        row = jnp.dot(w3t_ref[...], h2.T, preferred_element_type=jnp.float32)
        o_ref[...] = row + b3_ref[0, 0]
    else:
        # General path: (block_b, hid) @ (hid, out_dim).
        o_ref[...] = (jnp.dot(h2, w3t_ref[...].T,
                              preferred_element_type=jnp.float32)
                      + b3_ref[...])


def simple_model_forward(x, params, *, block_b=None):
    """SimpleModel forward pass via a single fused pallas_call.

    x: [B, input_dim] float32
    params: dict with w1[in,h] bf16, b1[1,h] f32, w2[h,h] bf16, b2[1,h] f32,
            w3t[out,h] bf16, b3[1,out] f32.
    Returns [B, out_dim] float32.
    """
    B, in_dim = x.shape
    hid = params["w1"].shape[1]
    out_dim = params["w3t"].shape[0]

    if block_b is None:
        if B <= 128:
            # Tiny batch: one tile; per-step overhead dominates anyway.
            block_b = B
        elif B <= 1024:
            # Two ~balanced, lane-aligned tiles -> both v7x TCs get work,
            # tiles stay <= 512 rows (v5e vreg-file safe).
            block_b = _round_up(pl.cdiv(B, 2), 128)
        else:
            # Large batch: 512-row tiles (sweep 512/1024/2048 per generation;
            # keep <= 512 on v5e).
            block_b = 512
    num_blocks = pl.cdiv(B, block_b)
    grid = (num_blocks,)

    # Lane-dense output path needs block_b to tile the (1, total) row exactly
    # in 128-lane-aligned chunks (or a single full-width tile).
    lane_dense = (out_dim == 1) and (num_blocks == 1 or block_b % 128 == 0)

    kernel = functools.partial(mlp_kernel, lane_dense=lane_dense)

    # Weights/biases use constant index maps -> resident across grid steps
    # (total weight footprint ~10 KB in bf16; VMEM is not a constraint).
    in_specs = [
        pl.BlockSpec((block_b, in_dim), lambda i: (i, 0)),   # x batch tile
        pl.BlockSpec((in_dim, hid), lambda i: (0, 0)),       # w1 (bf16)
        pl.BlockSpec((1, hid), lambda i: (0, 0)),            # b1
        pl.BlockSpec((hid, hid), lambda i: (0, 0)),          # w2 (bf16)
        pl.BlockSpec((1, hid), lambda i: (0, 0)),            # b2
        pl.BlockSpec((out_dim, hid), lambda i: (0, 0)),      # w3t (bf16)
    ]
    if lane_dense:
        # b3 is a single scalar -> SMEM, avoids a padded VMEM tile.
        in_specs.append(pl.BlockSpec(memory_space=pltpu.MemorySpace.SMEM))
        out_shape = jax.ShapeDtypeStruct((1, num_blocks * block_b), jnp.float32)
        out_specs = pl.BlockSpec((1, block_b), lambda i: (0, i))
    else:
        in_specs.append(pl.BlockSpec((1, out_dim), lambda i: (0, 0)))
        out_shape = jax.ShapeDtypeStruct((B, out_dim), jnp.float32)
        out_specs = pl.BlockSpec((block_b, out_dim), lambda i: (i, 0))

    out = pl.pallas_call(
        kernel,
        out_shape=out_shape,
        grid_spec=pl.GridSpec(
            grid=grid,
            in_specs=in_specs,
            out_specs=out_specs,
        ),
        compiler_params=pltpu.CompilerParams(
            dimension_semantics=("parallel",),
        ),
    )(x, params["w1"], params["b1"], params["w2"], params["b2"],
      params["w3t"], params["b3"])

    if lane_dense:
        # (1, num_blocks*block_b) row -> (B, 1); padded tail columns of a
        # ragged last block are dropped here.
        out = out[0, :B][:, None]
    return out


def init_params(key, input_dim=10, hidden_dim=64, output_dim=1):
    """Deterministic init mirroring nn.Linear; stores kernel-ready layouts."""
    k1, k2, k3, k4, k5, k6 = jax.random.split(key, 6)

    def lin(kw, kb, fan_in, fan_out):
        bound = 1.0 / jnp.sqrt(jnp.float32(fan_in))
        w = jax.random.uniform(kw, (fan_in, fan_out), jnp.float32, -bound, bound)
        b = jax.random.uniform(kb, (1, fan_out), jnp.float32, -bound, bound)
        return w, b

    w1, b1 = lin(k1, k2, input_dim, hidden_dim)
    w2, b2 = lin(k3, k4, hidden_dim, hidden_dim)
    w3, b3 = lin(k5, k6, hidden_dim, output_dim)
    # One-time hoisted work (perf review): bf16 weights, pre-transposed w3.
    return dict(
        w1=w1.astype(jnp.bfloat16), b1=b1,
        w2=w2.astype(jnp.bfloat16), b2=b2,
        w3t=w3.T.astype(jnp.bfloat16), b3=b3,
    )


def reference_forward(x, params):
    """Plain-JAX reference using the identical precision recipe (bf16 MXU
    operands, f32 accumulation, f32 bias/ReLU) for all three layers."""
    bf16 = jnp.bfloat16
    h1 = jnp.dot(x.astype(bf16), params["w1"],
                 preferred_element_type=jnp.float32) + params["b1"]
    h1 = jnp.maximum(h1, 0.0)
    h2 = jnp.dot(h1.astype(bf16), params["w2"],
                 preferred_element_type=jnp.float32) + params["b2"]
    h2 = jnp.maximum(h2, 0.0)
    return (jnp.dot(h2.astype(bf16), params["w3t"].T,
                    preferred_element_type=jnp.float32) + params["b3"])


if __name__ == "__main__":
    key = jax.random.PRNGKey(0)
    kx, kp = jax.random.split(key)

    IN, HID, OUT = 10, 64, 1
    params = init_params(kp, IN, HID, OUT)

    # Cases: tiny single tile, ragged 2-tile lane-dense, balanced 2-tile,
    # explicit small block (exercises the non-lane-dense fallback + edge
    # blocks), and a multi-step large batch (block_b=512 default).
    cases = [(8, None), (300, None), (512, None), (72, 32), (1536, None)]
    for B, bb in cases:
        xb = jax.random.normal(jax.random.fold_in(kx, B), (B, IN), jnp.float32)
        out = jax.block_until_ready(simple_model_forward(xb, params, block_b=bb))
        ref = reference_forward(xb, params)
        assert out.shape == (B, OUT)
        err = jnp.max(jnp.abs(out - ref))
        assert jnp.allclose(out, ref, atol=1e-2, rtol=1e-2), (
            f"mismatch at B={B}: max abs err {err}")

    # Exercise the output_dim > 1 path (general MXU final layer, VMEM b3).
    params8 = init_params(jax.random.fold_in(kp, 8), IN, HID, 8)
    xb = jax.random.normal(jax.random.fold_in(kx, 999), (64, IN), jnp.float32)
    out = jax.block_until_ready(simple_model_forward(xb, params8))
    ref = reference_forward(xb, params8)
    assert out.shape == (64, 8)
    assert jnp.allclose(out, ref, atol=1e-2, rtol=1e-2), (
        f"mismatch at out_dim=8: max abs err {jnp.max(jnp.abs(out - ref))}")

    print("KERNEL_OK")
</pallas_src>

<mosaic_0001>
module attributes {stable_mosaic.version = 11 : i64} {
  func.func @mlp_kernel(%arg0: i32, %arg1: memref<8x10xf32, #tpu.memory_space<vmem>>, %arg2: memref<10x64xbf16, #tpu.memory_space<vmem>>, %arg3: memref<1x64xf32, #tpu.memory_space<vmem>>, %arg4: memref<64x64xbf16, #tpu.memory_space<vmem>>, %arg5: memref<1x64xf32, #tpu.memory_space<vmem>>, %arg6: memref<1x64xbf16, #tpu.memory_space<vmem>>, %arg7: memref<1x1xf32, #tpu.memory_space<smem>>, %arg8: memref<1x8xf32, #tpu.memory_space<vmem>>) attributes {dimension_semantics = [#tpu.dimension_semantics<parallel>], iteration_bounds = array<i64: 1>, scalar_prefetch = 0 : i64, scratch_operands = 0 : i64, tpu.core_type = #tpu.core_type<tc>, window_params = [{transform_indices = @transform_0, window_bounds = array<i64: 8, 10>}, {pipeline_mode = #tpu.pipeline_mode<synchronous>, transform_indices = @transform_1, window_bounds = array<i64: 10, 64>}, {pipeline_mode = #tpu.pipeline_mode<synchronous>, transform_indices = @transform_2, window_bounds = array<i64: 1, 64>}, {pipeline_mode = #tpu.pipeline_mode<synchronous>, transform_indices = @transform_3, window_bounds = array<i64: 64, 64>}, {pipeline_mode = #tpu.pipeline_mode<synchronous>, transform_indices = @transform_4, window_bounds = array<i64: 1, 64>}, {pipeline_mode = #tpu.pipeline_mode<synchronous>, transform_indices = @transform_5, window_bounds = array<i64: 1, 64>}, {transform_indices = @transform_6, window_bounds = array<i64: 1, 1>}, {transform_indices = @transform_7, window_bounds = array<i64: 1, 8>}]} {
    %c0 = arith.constant 0 : index
    %c0_0 = arith.constant 0 : index
    %0 = vector.load %arg1[%c0, %c0_0] : memref<8x10xf32, #tpu.memory_space<vmem>>, vector<8x10xf32>
    %1 = arith.truncf %0 : vector<8x10xf32> to vector<8x10xbf16>
    %c0_1 = arith.constant 0 : index
    %c0_2 = arith.constant 0 : index
    %2 = vector.load %arg2[%c0_1, %c0_2] : memref<10x64xbf16, #tpu.memory_space<vmem>>, vector<10x64xbf16>
    %cst = arith.constant dense<0.000000e+00> : vector<8x64xf32>
    %3 = tpu.matmul %1, %2, %cst {dimension_numbers = #tpu.dot_dimension_numbers<[1], [0], [0], [1], [0, 0, 1, 1], [], []>} : vector<8x10xbf16>, vector<10x64xbf16>, vector<8x64xf32> -> vector<8x64xf32>
    %c0_3 = arith.constant 0 : index
    %c0_4 = arith.constant 0 : index
    %4 = vector.load %arg3[%c0_3, %c0_4] : memref<1x64xf32, #tpu.memory_space<vmem>>, vector<1x64xf32>
    %5 = vector.broadcast %4 : vector<1x64xf32> to vector<8x64xf32>
    %6 = arith.addf %3, %5 : vector<8x64xf32>
    %cst_5 = arith.constant 0.000000e+00 : f32
    %7 = vector.broadcast %cst_5 : f32 to vector<8x64xf32>
    %8 = arith.maximumf %6, %7 : vector<8x64xf32>
    %9 = arith.truncf %8 : vector<8x64xf32> to vector<8x64xbf16>
    %c0_6 = arith.constant 0 : index
    %c0_7 = arith.constant 0 : index
    %10 = vector.load %arg4[%c0_6, %c0_7] : memref<64x64xbf16, #tpu.memory_space<vmem>>, vector<64x64xbf16>
    %cst_8 = arith.constant dense<0.000000e+00> : vector<8x64xf32>
    %11 = tpu.matmul %9, %10, %cst_8 {dimension_numbers = #tpu.dot_dimension_numbers<[1], [0], [0], [1], [0, 0, 1, 1], [], []>} : vector<8x64xbf16>, vector<64x64xbf16>, vector<8x64xf32> -> vector<8x64xf32>
    %c0_9 = arith.constant 0 : index
    %c0_10 = arith.constant 0 : index
    %12 = vector.load %arg5[%c0_9, %c0_10] : memref<1x64xf32, #tpu.memory_space<vmem>>, vector<1x64xf32>
    %13 = vector.broadcast %12 : vector<1x64xf32> to vector<8x64xf32>
    %14 = arith.addf %11, %13 : vector<8x64xf32>
    %cst_11 = arith.constant 0.000000e+00 : f32
    %15 = vector.broadcast %cst_11 : f32 to vector<8x64xf32>
    %16 = arith.maximumf %14, %15 : vector<8x64xf32>
    %17 = arith.truncf %16 : vector<8x64xf32> to vector<8x64xbf16>
    %c0_12 = arith.constant 0 : index
    %c0_13 = arith.constant 0 : index
    %18 = vector.load %arg6[%c0_12, %c0_13] : memref<1x64xbf16, #tpu.memory_space<vmem>>, vector<1x64xbf16>
    %19 = tpu.transpose %17, [1, 0] : vector<8x64xbf16> -> vector<64x8xbf16>
    %cst_14 = arith.constant dense<0.000000e+00> : vector<1x8xf32>
    %20 = tpu.matmul %18, %19, %cst_14 {dimension_numbers = #tpu.dot_dimension_numbers<[1], [0], [0], [1], [0, 0, 1, 1], [], []>} : vector<1x64xbf16>, vector<64x8xbf16>, vector<1x8xf32> -> vector<1x8xf32>
    %c0_15 = arith.constant 0 : index
    %c0_16 = arith.constant 0 : index
    %21 = memref.load %arg7[%c0_15, %c0_16] : memref<1x1xf32, #tpu.memory_space<smem>>
    %22 = vector.broadcast %21 : f32 to vector<1x8xf32>
    %23 = arith.addf %20, %22 : vector<1x8xf32>
    %c0_17 = arith.constant 0 : index
    %c0_18 = arith.constant 0 : index
    %24 = vector.load %arg8[%c0_17, %c0_18] : memref<1x8xf32, #tpu.memory_space<vmem>>, vector<1x8xf32>
    tpu.vector_store %arg8[%c0_17, %c0_18], %23 {strides = array<i32>} : memref<1x8xf32, #tpu.memory_space<vmem>>, vector<1x8xf32>,
    return
  }
  func.func @transform_0(%arg0: i32) -> (i32, i32) {
    %c0_i32 = arith.constant 0 : i32
    %c0_i32_0 = arith.constant 0 : i32
    return %arg0, %c0_i32 : i32, i32
  }
  func.func @transform_1(%arg0: i32) -> (i32, i32) {
    %c0_i32 = arith.constant 0 : i32
    %c0_i32_0 = arith.constant 0 : i32
    %c0_i32_1 = arith.constant 0 : i32
    return %c0_i32, %c0_i32_0 : i32, i32
  }
  func.func @transform_2(%arg0: i32) -> (i32, i32) {
    %c0_i32 = arith.constant 0 : i32
    %c0_i32_0 = arith.constant 0 : i32
    %c0_i32_1 = arith.constant 0 : i32
    return %c0_i32, %c0_i32_0 : i32, i32
  }
  func.func @transform_3(%arg0: i32) -> (i32, i32) {
    %c0_i32 = arith.constant 0 : i32
    %c0_i32_0 = arith.constant 0 : i32
    %c0_i32_1 = arith.constant 0 : i32
    return %c0_i32, %c0_i32_0 : i32, i32
  }
  func.func @transform_4(%arg0: i32) -> (i32, i32) {
    %c0_i32 = arith.constant 0 : i32
    %c0_i32_0 = arith.constant 0 : i32
    %c0_i32_1 = arith.constant 0 : i32
    return %c0_i32, %c0_i32_0 : i32, i32
  }
  func.func @transform_5(%arg0: i32) -> (i32, i32) {
    %c0_i32 = arith.constant 0 : i32
    %c0_i32_0 = arith.constant 0 : i32
    %c0_i32_1 = arith.constant 0 : i32
    return %c0_i32, %c0_i32_0 : i32, i32
  }
  func.func @transform_6(%arg0: i32) -> (i32, i32) {
    %c0_i32 = arith.constant 0 : i32
    %c0_i32_0 = arith.constant 0 : i32
    %c0_i32_1 = arith.constant 0 : i32
    return %c0_i32, %c0_i32_0 : i32, i32
  }
  func.func @transform_7(%arg0: i32) -> (i32, i32) {
    %c0_i32 = arith.constant 0 : i32
    %c0_i32_0 = arith.constant 0 : i32
    return %c0_i32, %arg0 : i32, i32
  }
}

</mosaic_0001>

<llo_original>
// kernel: tpu_custom_call.1
$region0: #{tpu_custom_call.1}
  #allocation0 [shape = 'u32[]', space=smem, size = 0x4, offset = 0x4, fixed_abs, tag = 'smem constant byte address 0x4 - core index']
  #allocation1 [shape = 'u32[144,128]{1,0:T(1,128)}', space=vmem, size = 0x12000, scoped, tag = 'internal scratch']
  #allocation2 [shape = 'f32[1,1]{1,0:T(1,128)S(6)}', space=smem, size = 0x200, scoped, tag = 'scoped memory for tpu_custom_call.1']
  %s0 = inlined_call_operand.hbm [shape: f32[8,10], index: 0, kind: input, shape index: {}]
  %s1 = inlined_call_operand.hbm [shape: bf16[10,64], index: 1, kind: input, shape index: {}]
  %s2 = inlined_call_operand.vmem [shape: f32[1,64], index: 2, kind: input, shape index: {}]
  %s3 = inlined_call_operand.hbm [shape: bf16[64,64], index: 3, kind: input, shape index: {}]
  %s4 = inlined_call_operand.vmem [shape: f32[1,64], index: 4, kind: input, shape index: {}]
  %s5 = inlined_call_operand.vmem [shape: bf16[1,64], index: 5, kind: input, shape index: {}]
  %s6 = inlined_call_operand.<no memory space> [shape: f32[1,1], index: 6, kind: input, shape index: {}]
  %s7 = inlined_call_operand.hbm [shape: f32[1,8], index: 7, kind: output, shape index: {}]
  %s8 = sld [smem:[#allocation0]]
  $region50: #{tpu_custom_call.1} parent=0
    _
  %s10 = ssub.s32 1, %s8
  %s11 = scalar_select 0, %s10, %s8
  %12 = sst [smem:[#allocation2]] %s6
  $region1: #{tpu_custom_call.1} parent=0
    #allocation3 [shape = 'u8[4096]{0}', space=vmem, size = 0x1000, scoped, tag = 'input window, operand 0, single buffered']
    #allocation4 [shape = 's32[1]{0}', space=sflag, size = 0x4, scoped, tag = 'scoped memory for tpu_custom_call.1']
    #allocation5 [shape = 's32[1]{0}', space=sflag, size = 0x4, scoped, tag = 'scoped memory for tpu_custom_call.1']
    #allocation6 [shape = 'u8[4096]{0}', space=vmem, size = 0x1000, scoped, tag = 'input window, operand 1, single buffered']
    #allocation7 [shape = 's32[1]{0}', space=sflag, size = 0x4, scoped, tag = 'scoped memory for tpu_custom_call.1']
    #allocation8 [shape = 'u8[16384]{0}', space=vmem, size = 0x4000, scoped, tag = 'input window, operand 3, single buffered']
    #allocation9 [shape = 'u8[512]{0}', space=vmem, size = 0x400, scoped, tag = 'output window, operand 0, single buffered']
    %13 = vsyncpa [#allocation4], 0
    %14 = vsyncpa [#allocation7], 0
    %15 = vsyncpa [#allocation5], 0
    // Predicated region
    $region2: #{tpu_custom_call.1} parent=1 // pred_check
      _
    $region3: #{tpu_custom_call.1} parent=1 // pred_check_branch
      %17 = sbr.rel (0) target = $region5
    $region4: #{tpu_custom_call.1} parent=1 // pred_region
      %s19 = ssub.s32 128, 128
      %20 = vsyncadd [#allocation4], %s19
      %s22 = sshll.u32 [#allocation3], 4
      %s23 = int_to_ptr.vmem [resolvable:$true] %s22
      %25 = dma.hbm_to_vmem [thread:$0]  %s0, 128, %s23, [#allocation4]
    $region5: #{tpu_custom_call.1} parent=1 // pred_fallthru
      _
    // Predicated region
    $region6: #{tpu_custom_call.1} parent=1 // pred_check
      _
    $region7: #{tpu_custom_call.1} parent=1 // pred_check_branch
      %27 = sbr.rel (0) target = $region9
    $region8: #{tpu_custom_call.1} parent=1 // pred_region
      %s29 = ssub.s32 128, 128
      %30 = vsyncadd [#allocation7], %s29
      %s31 = sshll.u32 [#allocation6], 4
      %s32 = int_to_ptr.vmem [resolvable:$true] %s31
      %37 = dma.hbm_to_vmem [thread:$0]  %s1, 128, %s32, [#allocation7], 64, 64, 4
    $region9: #{tpu_custom_call.1} parent=1 // pred_fallthru
      _
    // Predicated region
    $region10: #{tpu_custom_call.1} parent=1 // pred_check
      _
    $region11: #{tpu_custom_call.1} parent=1 // pred_check_branch
      %39 = sbr.rel (0) target = $region13
    $region12: #{tpu_custom_call.1} parent=1 // pred_region
      _
    $region13: #{tpu_custom_call.1} parent=1 // pred_fallthru
      _
    // Predicated region
    $region14: #{tpu_custom_call.1} parent=1 // pred_check
      _
    $region15: #{tpu_custom_call.1} parent=1 // pred_check_branch
      %41 = sbr.rel (0) target = $region17
    $region16: #{tpu_custom_call.1} parent=1 // pred_region
      %s43 = ssub.s32 512, 512
      %44 = vsyncadd [#allocation7], %s43
      %s45 = sshll.u32 [#allocation8], 4
      %s46 = int_to_ptr.vmem [resolvable:$true] %s45
      %51 = dma.hbm_to_vmem [thread:$0]  %s3, 512, %s46, [#allocation7], 64, 64, 4
    $region17: #{tpu_custom_call.1} parent=1 // pred_fallthru
      _
    // Predicated region
    $region18: #{tpu_custom_call.1} parent=1 // pred_check
      _
    $region19: #{tpu_custom_call.1} parent=1 // pred_check_branch
      %53 = sbr.rel (0) target = $region21
    $region20: #{tpu_custom_call.1} parent=1 // pred_region
      _
    $region21: #{tpu_custom_call.1} parent=1 // pred_fallthru
      _
    // Predicated region
    $region22: #{tpu_custom_call.1} parent=1 // pred_check
      _
    $region23: #{tpu_custom_call.1} parent=1 // pred_check_branch
      %55 = sbr.rel (0) target = $region25
    $region24: #{tpu_custom_call.1} parent=1 // pred_region
      _
    $region25: #{tpu_custom_call.1} parent=1 // pred_fallthru
      _
    // Predicated region
    $region26: #{tpu_custom_call.1} parent=1 // pred_check
      _
    $region27: #{tpu_custom_call.1} parent=1 // pred_check_branch
      %57 = sbr.rel (0) target = $region29
    $region28: #{tpu_custom_call.1} parent=1 // pred_region
      _
    $region29: #{tpu_custom_call.1} parent=1 // pred_fallthru
      _
    // Predicated region
    $region30: #{tpu_custom_call.1} parent=1 // pred_check
      _
    $region31: #{tpu_custom_call.1} parent=1 // pred_check_branch
      %59 = sbr.rel (0) target = $region33
    $region32: #{tpu_custom_call.1} parent=1 // pred_region
      %60 = dma.done [#allocation4], 128
    $region33: #{tpu_custom_call.1} parent=1 // pred_fallthru
      _
    // Predicated region
    $region34: #{tpu_custom_call.1} parent=1 // pred_check
      _
    $region35: #{tpu_custom_call.1} parent=1 // pred_check_branch
      %62 = sbr.rel (0) target = $region37
    $region36: #{tpu_custom_call.1} parent=1 // pred_region
      %63 = dma.done [#allocation7], 128
    $region37: #{tpu_custom_call.1} parent=1 // pred_fallthru
      _
    // Predicated region
    $region38: #{tpu_custom_call.1} parent=1 // pred_check
      _
    $region39: #{tpu_custom_call.1} parent=1 // pred_check_branch
      %65 = sbr.rel (0) target = $region41
    $region40: #{tpu_custom_call.1} parent=1 // pred_region
      %66 = dma.done [#allocation7], 512
    $region41: #{tpu_custom_call.1} parent=1 // pred_fallthru
      _
    %v68 = vld [vmem:[#allocation3] sm:$0xff]
    %v69 = vpack.c.bf16 %v68, %v68
    %v70 = vld [vmem:[#allocation6] sm:$0xf]
    %v71 = vld [vmem:[#allocation6 + $0x4] sm:$0x1]
    %v72 = vld [vmem:[%s2] sm:$0x1]
    %v74 = vlaneseq
    %v75 = vshrl.u32 %v74, 7
    %v76 = vsub.s32 0, %v75
    %v77 = vrot.slane %v72, %v76
    %v81 = vunpack.c.l.b16 %v70
    %v82 = vunpack.c.l.b16 %v71
    %v83 = vpack.c.b16 %v82, %v81
    %vm84 = vcmask 80896
    %v86 = vsel %vm84, %v69, 0
    %vm88 = vcmask 1044480
    %v90 = vsel %vm88, %v83, 0
    %92 = vmatprep.subr.bf16.mxu0 0
    %93 = vmatpush1.bf16.msra.mxu0 %v90
    %94 = vmatprep.subr.bf16.mxu0 0
    %95 = vmatpush1.bf16.msra.mxu0 0
    %96 = vmatprep.subr.bf16.mxu0 0
    %97 = vmatpush1.bf16.msra.mxu0 0
    %98 = vmatprep.subr.bf16.mxu0 0
    %99 = vmatpush1.bf16.msra.mxu0 0
    %100 = vmatprep.subr.bf16.mxu0 0
    %101 = vmatpush1.bf16.msra.mxu0 0
    %102 = vmatprep.subr.bf16.mxu0 0
    %103 = vmatpush1.bf16.msra.mxu0 0
    %104 = vmatprep.subr.bf16.mxu0 0
    %105 = vmatpush1.bf16.msra.mxu0 0
    %106 = vmatprep.subr.bf16.mxu0 0
    %107 = vmatpush1.bf16.msra.mxu0 0
    %108 = vmatprep.subr.bf16.mxu0 0
    %109 = vmatpush1.bf16.msra.mxu0 0
    %110 = vmatprep.subr.bf16.mxu0 0
    %111 = vmatpush1.bf16.msra.mxu0 0
    %112 = vmatprep.subr.bf16.mxu0 0
    %113 = vmatpush1.bf16.msra.mxu0 0
    %114 = vmatprep.subr.bf16.mxu0 0
    %115 = vmatpush1.bf16.msra.mxu0 0
    %116 = vmatprep.subr.bf16.mxu0 0
    %117 = vmatpush1.bf16.msra.mxu0 0
    %118 = vmatprep.subr.bf16.mxu0 0
    %119 = vmatpush1.bf16.msra.mxu0 0
    %120 = vmatprep.subr.bf16.mxu0 0
    %121 = vmatpush1.bf16.msra.mxu0 0
    %122 = vmatprep.subr.bf16.mxu0 0
    %123 = vmatpush1.bf16.msra.mxu0 0
    %124 = vmatprep.mubr.bf16.mxu0 0
    %125 = vmatmul.mubr.bf16.gmra.mrb[0].mxu0 %v86
    %v126 = vpop.f32.mrb[0].mxu0
    %v127 = vadd.f32 %v77, %v126
    %v128 = vpop.f32.mrb[0].mxu0
    %v129 = vpop.f32.mrb[0].mxu0
    %v130 = vpop.f32.mrb[0].mxu0
    %131 = vdwg.mxu0
    %v132 = vmax.f32 %v127, 0.0
    %v133 = vpack.c.bf16 %v132, %v132
    %v134 = vld [vmem:[#allocation8] sm:$0xf]
    %v135 = vld [vmem:[#allocation8 + $0x4] sm:$0xf]
    %v136 = vld [vmem:[#allocation8 + $0x8] sm:$0xf]
    %v137 = vld [vmem:[#allocation8 + $0xc] sm:$0xf]
    %v138 = vld [vmem:[#allocation8 + $0x10] sm:$0xf]
    %v139 = vld [vmem:[#allocation8 + $0x14] sm:$0xf]
    %v140 = vld [vmem:[#allocation8 + $0x18] sm:$0xf]
    %v141 = vld [vmem:[#allocation8 + $0x1c] sm:$0xf]
    %v142 = vld [vmem:[%s4] sm:$0x1]
    %v144 = vlaneseq
    %v145 = vshrl.u32 %v144, 7
    %v146 = vsub.s32 0, %v145
    %v147 = vrot.slane %v142, %v146
    %v157 = vunpack.c.l.b16 %v134
    %v158 = vunpack.c.l.b16 %v135
    %v159 = vunpack.c.l.b16 %v136
    %v160 = vunpack.c.l.b16 %v137
    %v161 = vunpack.c.l.b16 %v138
    %v162 = vunpack.c.l.b16 %v139
    %v163 = vunpack.c.l.b16 %v140
    %v164 = vunpack.c.l.b16 %v141
    %v165 = vpack.c.b16 %v158, %v157
    %v166 = vpack.c.b16 %v160, %v159
    %v167 = vpack.c.b16 %v162, %v161
    %v168 = vpack.c.b16 %v164, %v163
    %vm173 = vcmask 523264
    %v175 = vsel %vm173, %v133, 0
    %177 = vmatprep.subr.bf16.mxu0 0
    %178 = vmatpush1.bf16.msra.mxu0 %v165
    %179 = vmatprep.subr.bf16.mxu0 0
    %180 = vmatpush1.bf16.msra.mxu0 %v166
    %181 = vmatprep.subr.bf16.mxu0 0
    %182 = vmatpush1.bf16.msra.mxu0 %v167
    %183 = vmatprep.subr.bf16.mxu0 0
    %184 = vmatpush1.bf16.msra.mxu0 %v168
    %185 = vmatprep.subr.bf16.mxu0 0
    %186 = vmatpush1.bf16.msra.mxu0 0
    %187 = vmatprep.subr.bf16.mxu0 0
    %188 = vmatpush1.bf16.msra.mxu0 0
    %189 = vmatprep.subr.bf16.mxu0 0
    %190 = vmatpush1.bf16.msra.mxu0 0
    %191 = vmatprep.subr.bf16.mxu0 0
    %192 = vmatpush1.bf16.msra.mxu0 0
    %193 = vmatprep.subr.bf16.mxu0 0
    %194 = vmatpush1.bf16.msra.mxu0 0
    %195 = vmatprep.subr.bf16.mxu0 0
    %196 = vmatpush1.bf16.msra.mxu0 0
    %197 = vmatprep.subr.bf16.mxu0 0
    %198 = vmatpush1.bf16.msra.mxu0 0
    %199 = vmatprep.subr.bf16.mxu0 0
    %200 = vmatpush1.bf16.msra.mxu0 0
    %201 = vmatprep.subr.bf16.mxu0 0
    %202 = vmatpush1.bf16.msra.mxu0 0
    %203 = vmatprep.subr.bf16.mxu0 0
    %204 = vmatpush1.bf16.msra.mxu0 0
    %205 = vmatprep.subr.bf16.mxu0 0
    %206 = vmatpush1.bf16.msra.mxu0 0
    %207 = vmatprep.subr.bf16.mxu0 0
    %208 = vmatpush1.bf16.msra.mxu0 0
    %209 = vmatprep.mubr.bf16.mxu0 0
    %210 = vmatmul.mubr.bf16.gmra.mrb[0].mxu0 %v175
    %v211 = vpop.f32.mrb[0].mxu0
    %v212 = vadd.f32 %v147, %v211
    %v213 = vpop.f32.mrb[0].mxu0
    %v214 = vpop.f32.mrb[0].mxu0
    %v215 = vpop.f32.mrb[0].mxu0
    %216 = vdwg.mxu0
    %v217 = vmax.f32 %v212, 0.0
    %v218 = vpack.c.bf16 %v217, %v217
    %v219 = vld [vmem:[%s5] sm:$0x1]
    %s220 = sld [smem:[#allocation2]]
    %v221 = vstv %s220
    %v223 = vsel %vm173, %v219, 0
    %v226 = vsel %vm173, %v218, 0
    %228 = vmatprep.subr.bf16.mxu0 0
    %229 = vmatpush1.bf16.xpose.msra.mxu0 %v226
    %230 = vmatprep.subr.bf16.mxu0 0
    %231 = vmatpush1.bf16.xpose.msra.mxu0 0
    %232 = vmatprep.subr.bf16.mxu0 0
    %233 = vmatpush1.bf16.xpose.msra.mxu0 0
    %234 = vmatprep.subr.bf16.mxu0 0
    %235 = vmatpush1.bf16.xpose.msra.mxu0 0
    %236 = vmatprep.subr.bf16.mxu0 0
    %237 = vmatpush1.bf16.xpose.msra.mxu0 0
    %238 = vmatprep.subr.bf16.mxu0 0
    %239 = vmatpush1.bf16.xpose.msra.mxu0 0
    %240 = vmatprep.subr.bf16.mxu0 0
    %241 = vmatpush1.bf16.xpose.msra.mxu0 0
    %242 = vmatprep.subr.bf16.mxu0 0
    %243 = vmatpush1.bf16.xpose.msra.mxu0 0
    %244 = vmatprep.subr.bf16.mxu0 0
    %245 = vmatpush1.bf16.xpose.msra.mxu0 0
    %246 = vmatprep.subr.bf16.mxu0 0
    %247 = vmatpush1.bf16.xpose.msra.mxu0 0
    %248 = vmatprep.subr.bf16.mxu0 0
    %249 = vmatpush1.bf16.xpose.msra.mxu0 0
    %250 = vmatprep.subr.bf16.mxu0 0
    %251 = vmatpush1.bf16.xpose.msra.mxu0 0
    %252 = vmatprep.subr.bf16.mxu0 0
    %253 = vmatpush1.bf16.xpose.msra.mxu0 0
    %254 = vmatprep.subr.bf16.mxu0 0
    %255 = vmatpush1.bf16.xpose.msra.mxu0 0
    %256 = vmatprep.subr.bf16.mxu0 0
    %257 = vmatpush1.bf16.xpose.msra.mxu0 0
    %258 = vmatprep.subr.bf16.mxu0 0
    %259 = vmatpush1.bf16.xpose.msra.mxu0 0
    %260 = vmatprep.mubr.bf16.mxu0 0
    %261 = vmatmul.mubr.bf16.gmra.mrb[0].mxu0 %v223
    %v262 = vpop.f32.mrb[0].mxu0
    %v263 = vadd.f32 %v221, %v262
    %v264 = vpop.f32.mrb[0].mxu0
    %v265 = vpop.f32.mrb[0].mxu0
    %v266 = vpop.f32.mrb[0].mxu0
    %267 = vdwg.mxu0
    %vm268 = vcmask 57344
    %269 = vst.msk [vmem:[#allocation9] sm:$0x1] %vm268, %v263
    // Predicated region
    $region42: #{tpu_custom_call.1} parent=1 // pred_check
      _
    $region43: #{tpu_custom_call.1} parent=1 // pred_check_branch
      %271 = sbr.rel (0) target = $region45
    $region44: #{tpu_custom_call.1} parent=1 // pred_region
      %s273 = ssub.s32 16, 16
      %274 = vsyncadd [#allocation5], %s273
      %s276 = sshll.u32 [#allocation9], 4
      %s277 = int_to_ptr.vmem [resolvable:$true] %s276
      %279 = dma.vmem_to_hbm [thread:$0]  %s277, 16, %s7, [#allocation5]
    $region45: #{tpu_custom_call.1} parent=1 // pred_fallthru
      _
    // Predicated region
    $region46: #{tpu_custom_call.1} parent=1 // pred_check
      _
    $region47: #{tpu_custom_call.1} parent=1 // pred_check_branch
      %281 = sbr.rel (0) target = $region49
    $region48: #{tpu_custom_call.1} parent=1 // pred_region
      %282 = dma.done [#allocation5], 16
    $region49: #{tpu_custom_call.1} parent=1 // pred_fallthru
      _
    %283 = vsyncpa [#allocation4], 1
    %284 = vsyncpa [#allocation7], 1
    %285 = vsyncpa [#allocation5], 1

</llo_original>
